<compile_context>
chip_gen: v6e
topology: v6e:2x2x1
jax: 0.10.0
libtpu: 0.0.40
codegen_flags: <defaults>
</compile_context>

<pallas_src>
import functools

import jax
import jax.numpy as jnp
from jax.experimental import pallas as pl
from jax.experimental.pallas import tpu as pltpu


def _round_up(x, m):
    return (x + m - 1) // m * m


# --------------------------------------------------------------------------- #
# Pass 1: feature projection  seq_fts = seq @ W   (flattened over B*N rows)
# --------------------------------------------------------------------------- #
def _proj_kernel(seq_ref, w_ref, out_ref):
    # seq_ref: (TMP, F_in), w_ref: (F_in, F_out_pad), out_ref: (TMP, F_out_pad)
    out_ref[...] = jnp.dot(
        seq_ref[...], w_ref[...], preferred_element_type=jnp.float32
    ).astype(out_ref.dtype)


# --------------------------------------------------------------------------- #
# Pass 2: aggregation  out = adj @ seq_fts (+ seq_fts*skip) + bias
# --------------------------------------------------------------------------- #
def _agg_kernel(adj_ref, fts_ref, bias_ref, out_ref, acc_ref):
    # adj_ref: (1, TM, TK), fts_ref: (1, TK, F), bias_ref: (1, F)
    # out_ref: (1, TM, F),  acc_ref: (TM, F) f32 scratch
    k = pl.program_id(2)

    @pl.when(k == 0)
    def _():
        acc_ref[...] = jnp.zeros_like(acc_ref)

    acc_ref[...] += jnp.dot(
        adj_ref[0], fts_ref[0], preferred_element_type=jnp.float32
    )

    @pl.when(k == pl.num_programs(2) - 1)
    def _():
        out_ref[0] = (acc_ref[...] + bias_ref[...]).astype(out_ref.dtype)


def _agg_skip_kernel(adj_ref, fts_ref, fts_row_ref, bias_ref, skip_ref,
                     out_ref, acc_ref):
    k = pl.program_id(2)

    @pl.when(k == 0)
    def _():
        acc_ref[...] = jnp.zeros_like(acc_ref)

    acc_ref[...] += jnp.dot(
        adj_ref[0], fts_ref[0], preferred_element_type=jnp.float32
    )

    @pl.when(k == pl.num_programs(2) - 1)
    def _():
        skip_out = fts_row_ref[0].astype(jnp.float32) * skip_ref[...]
        out_ref[0] = (acc_ref[...] + skip_out + bias_ref[...]).astype(out_ref.dtype)


# --------------------------------------------------------------------------- #
# Wrapper
# --------------------------------------------------------------------------- #
@functools.partial(jax.jit, static_argnames=("skip", "use_bf16"))
def gcn_forward(seq, adj, weight, bias, skip_vec=None, *, skip=False,
                use_bf16=False):
    """Pallas GCN forward.

    seq:      [B, N, F_in]  float32
    adj:      [B, N, N]     float32 (dense, row-normalized or not)
    weight:   [F_in, F_out] float32 (transposed vs. torch Linear weight)
    bias:     [1, F_out]    float32
    skip_vec: [1, F_out]    float32 (only used when skip=True)
    """
    B, N, F_in = seq.shape
    F_out = weight.shape[1]
    out_dtype = seq.dtype

    # ---- padding / tiling parameters (lane-dense, MXU-friendly) ------------
    n_pad = _round_up(N, 128)
    f_out_pad = _round_up(F_out, 128)
    tile = 256 if n_pad % 256 == 0 else 128       # 256 tiles on v6e/v7x MXU when possible
    tm = tk = tile

    compute_dtype = jnp.bfloat16 if use_bf16 else seq.dtype

    seq_p = jnp.pad(seq, ((0, 0), (0, n_pad - N), (0, 0))).astype(compute_dtype)
    adj_p = jnp.pad(adj, ((0, 0), (0, n_pad - N), (0, n_pad - N))).astype(compute_dtype)
    w_p = jnp.pad(weight, ((0, 0), (0, f_out_pad - F_out))).astype(compute_dtype)
    b_p = jnp.pad(bias, ((0, 0), (0, f_out_pad - F_out))).astype(jnp.float32)

    # ---------------- Pass 1: projection (hoisted, done once) ---------------
    rows = B * n_pad
    tmp = 256 if rows % 256 == 0 else 128
    seq_flat = seq_p.reshape(rows, F_in)

    proj_cost = pl.CostEstimate(
        flops=2 * rows * F_in * f_out_pad,
        transcendentals=0,
        bytes_accessed=(seq_flat.size * seq_flat.dtype.itemsize
                        + w_p.size * w_p.dtype.itemsize
                        + rows * f_out_pad * jnp.dtype(compute_dtype).itemsize),
    )

    seq_fts = pl.pallas_call(
        _proj_kernel,
        out_shape=jax.ShapeDtypeStruct((rows, f_out_pad), compute_dtype),
        grid_spec=pltpu.PrefetchScalarGridSpec(
            num_scalar_prefetch=0,
            grid=(rows // tmp,),
            in_specs=[
                pl.BlockSpec((tmp, F_in), lambda i: (i, 0)),
                pl.BlockSpec((F_in, f_out_pad), lambda i: (0, 0)),
            ],
            out_specs=pl.BlockSpec((tmp, f_out_pad), lambda i: (i, 0)),
        ),
        compiler_params=pltpu.CompilerParams(dimension_semantics=("parallel",)),
        cost_estimate=proj_cost,
    )(seq_flat, w_p)
    seq_fts = seq_fts.reshape(B, n_pad, f_out_pad)

    # ---------------- Pass 2: tiled adjacency aggregation -------------------
    grid = (B, n_pad // tm, n_pad // tk)   # reduction axis (k) last

    in_specs = [
        pl.BlockSpec((1, tm, tk), lambda b, i, k: (b, i, k)),          # adj tile
        pl.BlockSpec((1, tk, f_out_pad), lambda b, i, k: (b, k, 0)),   # seq_fts (k rows)
    ]
    args = [adj_p, seq_fts]
    kernel = _agg_kernel

    if skip:
        in_specs.append(
            pl.BlockSpec((1, tm, f_out_pad), lambda b, i, k: (b, i, 0)))  # seq_fts (i rows)
        args.append(seq_fts)
        kernel = _agg_skip_kernel

    in_specs.append(pl.BlockSpec((1, f_out_pad), lambda b, i, k: (0, 0)))  # bias (resident)
    args.append(b_p)

    if skip:
        s_p = jnp.pad(skip_vec, ((0, 0), (0, f_out_pad - F_out))).astype(jnp.float32)
        in_specs.append(pl.BlockSpec((1, f_out_pad), lambda b, i, k: (0, 0)))  # skip vec
        args.append(s_p)

    agg_cost = pl.CostEstimate(
        flops=2 * B * n_pad * n_pad * f_out_pad,
        transcendentals=0,
        bytes_accessed=(adj_p.size * adj_p.dtype.itemsize
                        + seq_fts.size * seq_fts.dtype.itemsize
                        + B * n_pad * f_out_pad * jnp.dtype(out_dtype).itemsize),
    )

    out_pad = pl.pallas_call(
        kernel,
        out_shape=jax.ShapeDtypeStruct((B, n_pad, f_out_pad), out_dtype),
        grid_spec=pltpu.PrefetchScalarGridSpec(
            num_scalar_prefetch=0,
            grid=grid,
            in_specs=in_specs,
            out_specs=pl.BlockSpec((1, tm, f_out_pad), lambda b, i, k: (b, i, 0)),
            scratch_shapes=[pltpu.VMEM((tm, f_out_pad), jnp.float32)],
        ),
        compiler_params=pltpu.CompilerParams(
            dimension_semantics=("parallel", "parallel", "arbitrary"),
        ),
        cost_estimate=agg_cost,
    )(*args)

    return out_pad[:, :N, :F_out]


# --------------------------------------------------------------------------- #
# Parameter init mirroring the PyTorch module
# --------------------------------------------------------------------------- #
def init_gcn_params(key, in_ft, out_ft):
    """Linear weight: xavier_uniform_ on [out_ft, in_ft] -> stored transposed;
    bias / skip: normal(mean=0, std=0.1)."""
    kw, kb, ks = jax.random.split(key, 3)
    limit = (6.0 / (in_ft + out_ft)) ** 0.5
    w_torch_layout = jax.random.uniform(
        kw, (out_ft, in_ft), minval=-limit, maxval=limit, dtype=jnp.float32)
    weight = w_torch_layout.T                     # [in_ft, out_ft]
    bias = 0.1 * jax.random.normal(kb, (1, out_ft), dtype=jnp.float32)
    skip_vec = 0.1 * jax.random.normal(ks, (1, out_ft), dtype=jnp.float32)
    return weight, bias, skip_vec


def _reference(seq, adj, weight, bias, skip_vec=None, skip=False):
    seq_fts = seq @ weight
    out = jnp.einsum("bnm,bmf->bnf", adj, seq_fts) + bias
    if skip:
        out = out + seq_fts * skip_vec
    return out


if __name__ == "__main__":
    key = jax.random.PRNGKey(0)

    # ---- small shapes matching the module's forward (single-tile path) -----
    B, N, F_in, F_out = 2, 16, 32, 32
    k_seq, k_adj, k_param, k2 = jax.random.split(key, 4)

    seq = jax.random.normal(k_seq, (B, N, F_in), dtype=jnp.float32)
    adj_raw = jax.random.uniform(k_adj, (B, N, N), dtype=jnp.float32)
    adj = adj_raw / jnp.sum(adj_raw, axis=-1, keepdims=True)
    weight, bias, skip_vec = init_gcn_params(k_param, F_in, F_out)

    out = gcn_forward(seq, adj, weight, bias, skip=False)
    jax.block_until_ready(out)
    out_skip = gcn_forward(seq, adj, weight, bias, skip_vec, skip=True)
    jax.block_until_ready(out_skip)
    out_bf16 = gcn_forward(seq, adj, weight, bias, skip_vec, skip=True, use_bf16=True)
    jax.block_until_ready(out_bf16)

    ref = _reference(seq, adj, weight, bias)
    ref_skip = _reference(seq, adj, weight, bias, skip_vec, skip=True)
    assert jnp.allclose(out, ref, atol=1e-5, rtol=1e-5)
    assert jnp.allclose(out_skip, ref_skip, atol=1e-5, rtol=1e-5)
    assert jnp.allclose(out_bf16, ref_skip, atol=5e-2, rtol=5e-2)

    # ---- slightly larger, non-aligned shapes (exercises padding + k-tiled
    #      accumulation path: n_pad=384 -> grid (B, 3, 3)) --------------------
    B2, N2, F_in2, F_out2 = 2, 300, 48, 96
    ks2, ka2, kp2 = jax.random.split(k2, 3)
    seq2 = jax.random.normal(ks2, (B2, N2, F_in2), dtype=jnp.float32)
    adj2_raw = jax.random.uniform(ka2, (B2, N2, N2), dtype=jnp.float32)
    adj2 = adj2_raw / jnp.sum(adj2_raw, axis=-1, keepdims=True)
    weight2, bias2, skip_vec2 = init_gcn_params(kp2, F_in2, F_out2)

    out2 = gcn_forward(seq2, adj2, weight2, bias2, skip_vec2, skip=True)
    jax.block_until_ready(out2)
    ref2 = _reference(seq2, adj2, weight2, bias2, skip_vec2, skip=True)
    assert jnp.allclose(out2, ref2, atol=1e-4, rtol=1e-4)

    print("KERNEL_OK")
</pallas_src>

<mosaic_0001>
module attributes {stable_mosaic.version = 11 : i64} {
  func.func @_proj_kernel(%arg0: i32, %arg1: memref<256x32xf32, #tpu.memory_space<vmem>>, %arg2: memref<32x128xf32, #tpu.memory_space<vmem>>, %arg3: memref<256x128xf32, #tpu.memory_space<vmem>>) attributes {dimension_semantics = [#tpu.dimension_semantics<parallel>], iteration_bounds = array<i64: 1>, scalar_prefetch = 0 : i64, scratch_operands = 0 : i64, tpu.core_type = #tpu.core_type<tc>, window_params = [{transform_indices = @transform_0, window_bounds = array<i64: 256, 32>}, {pipeline_mode = #tpu.pipeline_mode<synchronous>, transform_indices = @transform_1, window_bounds = array<i64: 32, 128>}, {transform_indices = @transform_2, window_bounds = array<i64: 256, 128>}]} {
    %c0 = arith.constant 0 : index
    %c0_0 = arith.constant 0 : index
    %0 = vector.load %arg1[%c0, %c0_0] : memref<256x32xf32, #tpu.memory_space<vmem>>, vector<256x32xf32>
    %c0_1 = arith.constant 0 : index
    %c0_2 = arith.constant 0 : index
    %1 = vector.load %arg2[%c0_1, %c0_2] : memref<32x128xf32, #tpu.memory_space<vmem>>, vector<32x128xf32>
    %cst = arith.constant dense<0.000000e+00> : vector<256x128xf32>
    %2 = tpu.matmul %0, %1, %cst {dimension_numbers = #tpu.dot_dimension_numbers<[1], [0], [0], [1], [0, 0, 1, 1], [], []>} : vector<256x32xf32>, vector<32x128xf32>, vector<256x128xf32> -> vector<256x128xf32>
    %c0_3 = arith.constant 0 : index
    %c0_4 = arith.constant 0 : index
    %3 = vector.load %arg3[%c0_3, %c0_4] : memref<256x128xf32, #tpu.memory_space<vmem>>, vector<256x128xf32>
    tpu.vector_store %arg3[%c0_3, %c0_4], %2 {strides = array<i32>} : memref<256x128xf32, #tpu.memory_space<vmem>>, vector<256x128xf32>,
    return
  }
  func.func @transform_0(%arg0: i32) -> (i32, i32) {
    %c0_i32 = arith.constant 0 : i32
    %c0_i32_0 = arith.constant 0 : i32
    return %arg0, %c0_i32 : i32, i32
  }
  func.func @transform_1(%arg0: i32) -> (i32, i32) {
    %c0_i32 = arith.constant 0 : i32
    %c0_i32_0 = arith.constant 0 : i32
    %c0_i32_1 = arith.constant 0 : i32
    return %c0_i32, %c0_i32_0 : i32, i32
  }
  func.func @transform_2(%arg0: i32) -> (i32, i32) {
    %c0_i32 = arith.constant 0 : i32
    %c0_i32_0 = arith.constant 0 : i32
    return %arg0, %c0_i32 : i32, i32
  }
}

module attributes {stable_mosaic.version = 11 : i64} {
  func.func @_agg_kernel(%arg0: i32, %arg1: i32, %arg2: i32, %arg3: memref<1x128x128xf32, #tpu.memory_space<vmem>>, %arg4: memref<1x128x128xf32, #tpu.memory_space<vmem>>, %arg5: memref<1x128xf32, #tpu.memory_space<vmem>>, %arg6: memref<1x128x128xf32, #tpu.memory_space<vmem>>, %arg7: memref<128x128xf32, #tpu.memory_space<vmem>>) attributes {dimension_semantics = [#tpu.dimension_semantics<parallel>, #tpu.dimension_semantics<parallel>, #tpu.dimension_semantics<arbitrary>], iteration_bounds = array<i64: 2, 1, 1>, scalar_prefetch = 0 : i64, scratch_operands = 1 : i64, tpu.core_type = #tpu.core_type<tc>, window_params = [{transform_indices = @transform_0, window_bounds = array<i64: 1, 128, 128>}, {transform_indices = @transform_1, window_bounds = array<i64: 1, 128, 128>}, {pipeline_mode = #tpu.pipeline_mode<synchronous>, transform_indices = @transform_2, window_bounds = array<i64: 1, 128>}, {transform_indices = @transform_3, window_bounds = array<i64: 1, 128, 128>}]} {
    %c0_i32 = arith.constant 0 : i32
    %0 = arith.cmpi eq, %arg2, %c0_i32 : i32
    %1 = arith.extui %0 : i1 to i32
    %c0_i32_0 = arith.constant 0 : i32
    %2 = arith.cmpi ne, %1, %c0_i32_0 : i32
    scf.if %2 {
      %cst_12 = arith.constant 0.000000e+00 : f32
      %14 = vector.broadcast %cst_12 : f32 to vector<128x128xf32>
      %c0_13 = arith.constant 0 : index
      %c0_14 = arith.constant 0 : index
      %15 = vector.load %arg7[%c0_13, %c0_14] : memref<128x128xf32, #tpu.memory_space<vmem>>, vector<128x128xf32>
      tpu.vector_store %arg7[%c0_13, %c0_14], %14 {strides = array<i32>} : memref<128x128xf32, #tpu.memory_space<vmem>>, vector<128x128xf32>,
    } else {
    }
    %c0 = arith.constant 0 : index
    %c0_1 = arith.constant 0 : index
    %3 = vector.load %arg7[%c0, %c0_1] : memref<128x128xf32, #tpu.memory_space<vmem>>, vector<128x128xf32>
    %c0_2 = arith.constant 0 : index
    %c0_3 = arith.constant 0 : index
    %c0_4 = arith.constant 0 : index
    %4 = vector.load %arg3[%c0_2, %c0_3, %c0_4] : memref<1x128x128xf32, #tpu.memory_space<vmem>>, vector<1x128x128xf32>
    %5 = vector.shape_cast %4 : vector<1x128x128xf32> to vector<128x128xf32>
    %c0_5 = arith.constant 0 : index
    %c0_6 = arith.constant 0 : index
    %c0_7 = arith.constant 0 : index
    %6 = vector.load %arg4[%c0_5, %c0_6, %c0_7] : memref<1x128x128xf32, #tpu.memory_space<vmem>>, vector<1x128x128xf32>
    %7 = vector.shape_cast %6 : vector<1x128x128xf32> to vector<128x128xf32>
    %cst = arith.constant dense<0.000000e+00> : vector<128x128xf32>
    %8 = tpu.matmul %5, %7, %cst {dimension_numbers = #tpu.dot_dimension_numbers<[1], [0], [0], [1], [0, 0, 1, 1], [], []>} : vector<128x128xf32>, vector<128x128xf32>, vector<128x128xf32> -> vector<128x128xf32>
    %9 = arith.addf %3, %8 : vector<128x128xf32>
    %c0_8 = arith.constant 0 : index
    %c0_9 = arith.constant 0 : index
    %10 = vector.load %arg7[%c0_8, %c0_9] : memref<128x128xf32, #tpu.memory_space<vmem>>, vector<128x128xf32>
    tpu.vector_store %arg7[%c0_8, %c0_9], %9 {strides = array<i32>} : memref<128x128xf32, #tpu.memory_space<vmem>>, vector<128x128xf32>,
    %c0_i32_10 = arith.constant 0 : i32
    %11 = arith.cmpi eq, %arg2, %c0_i32_10 : i32
    %12 = arith.extui %11 : i1 to i32
    %c0_i32_11 = arith.constant 0 : i32
    %13 = arith.cmpi ne, %12, %c0_i32_11 : i32
    scf.if %13 {
      %c0_12 = arith.constant 0 : index
      %c0_13 = arith.constant 0 : index
      %14 = vector.load %arg7[%c0_12, %c0_13] : memref<128x128xf32, #tpu.memory_space<vmem>>, vector<128x128xf32>
      %c0_14 = arith.constant 0 : index
      %c0_15 = arith.constant 0 : index
      %15 = vector.load %arg5[%c0_14, %c0_15] : memref<1x128xf32, #tpu.memory_space<vmem>>, vector<1x128xf32>
      %16 = vector.broadcast %15 : vector<1x128xf32> to vector<128x128xf32>
      %17 = arith.addf %14, %16 : vector<128x128xf32>
      %c0_16 = arith.constant 0 : index
      %c0_17 = arith.constant 0 : index
      %c0_18 = arith.constant 0 : index
      %18 = vector.load %arg6[%c0_16, %c0_17, %c0_18] : memref<1x128x128xf32, #tpu.memory_space<vmem>>, vector<1x128x128xf32>
      %19 = vector.shape_cast %18 : vector<1x128x128xf32> to vector<128x128xf32>
      %20 = vector.shape_cast %17 : vector<128x128xf32> to vector<1x128x128xf32>
      tpu.vector_store %arg6[%c0_16, %c0_17, %c0_18], %20 {strides = array<i32>} : memref<1x128x128xf32, #tpu.memory_space<vmem>>, vector<1x128x128xf32>,
    } else {
    }
    return
  }
  func.func @transform_0(%arg0: i32, %arg1: i32, %arg2: i32) -> (i32, i32, i32) {
    %c0_i32 = arith.constant 0 : i32
    return %arg0, %arg1, %arg2 : i32, i32, i32
  }
  func.func @transform_1(%arg0: i32, %arg1: i32, %arg2: i32) -> (i32, i32, i32) {
    %c0_i32 = arith.constant 0 : i32
    %c0_i32_0 = arith.constant 0 : i32
    return %arg0, %arg2, %c0_i32 : i32, i32, i32
  }
  func.func @transform_2(%arg0: i32, %arg1: i32, %arg2: i32) -> (i32, i32) {
    %c0_i32 = arith.constant 0 : i32
    %c0_i32_0 = arith.constant 0 : i32
    %c0_i32_1 = arith.constant 0 : i32
    return %c0_i32, %c0_i32_0 : i32, i32
  }
  func.func @transform_3(%arg0: i32, %arg1: i32, %arg2: i32) -> (i32, i32, i32) {
    %c0_i32 = arith.constant 0 : i32
    %c0_i32_0 = arith.constant 0 : i32
    return %arg0, %arg1, %c0_i32 : i32, i32, i32
  }
}

</mosaic_0001>

<llo_original>
// kernel: gcn_forward.2
$region0: #{gcn_forward.2}
  #allocation0 [shape = 'u32[]', space=smem, size = 0x4, offset = 0x4, fixed_abs, tag = 'smem constant byte address 0x4 - core index']
  #allocation1 [shape = 'u32[144,128]{1,0:T(1,128)}', space=vmem, size = 0x12000, scoped, tag = 'internal scratch']
  %s0 = inlined_call_operand.vmem [shape: f32[256,32], index: 0, kind: input, shape index: {}]
  %s1 = inlined_call_operand.vmem [shape: f32[32,128], index: 1, kind: input, shape index: {}]
  %s2 = inlined_call_operand.vmem [shape: f32[256,128], index: 2, kind: output, shape index: {}]
  %s3 = sld [smem:[#allocation0]]
  $region18: #{gcn_forward.2} parent=0
    _
  %s5 = ssub.s32 1, %s3
  %s6 = scalar_select 0, %s5, %s3
  // Predicated region
  $region2: #{gcn_forward.2} parent=0 // pred_check
    _
  $region3: #{gcn_forward.2} parent=0 // pred_check_branch
    %8 = sbr.rel (0) target = $region5
  $region4: #{gcn_forward.2} parent=0 // pred_region
    _
  $region5: #{gcn_forward.2} parent=0 // pred_fallthru
    _
  // Predicated region
  $region6: #{gcn_forward.2} parent=0 // pred_check
    _
  $region7: #{gcn_forward.2} parent=0 // pred_check_branch
    %10 = sbr.rel (0) target = $region9
  $region8: #{gcn_forward.2} parent=0 // pred_region
    _
  $region9: #{gcn_forward.2} parent=0 // pred_fallthru
    _
  %v11 = vld [vmem:[%s0] sm:$0xff]
  %v12 = vld [vmem:[%s0 + $0x8] sm:$0xff]
  %v13 = vld [vmem:[%s0 + $0x10] sm:$0xff]
  %v14 = vld [vmem:[%s0 + $0x18] sm:$0xff]
  %v15 = vld [vmem:[%s0 + $0x20] sm:$0xff]
  %v16 = vld [vmem:[%s0 + $0x28] sm:$0xff]
  %v17 = vld [vmem:[%s0 + $0x30] sm:$0xff]
  %v18 = vld [vmem:[%s0 + $0x38] sm:$0xff]
  %v19 = vld [vmem:[%s0 + $0x40] sm:$0xff]
  %v20 = vld [vmem:[%s0 + $0x48] sm:$0xff]
  %v21 = vld [vmem:[%s0 + $0x50] sm:$0xff]
  %v22 = vld [vmem:[%s0 + $0x58] sm:$0xff]
  %v23 = vld [vmem:[%s0 + $0x60] sm:$0xff]
  %v24 = vld [vmem:[%s0 + $0x68] sm:$0xff]
  %v25 = vld [vmem:[%s0 + $0x70] sm:$0xff]
  %v26 = vld [vmem:[%s0 + $0x78] sm:$0xff]
  %v27 = vld [vmem:[%s0 + $0x80] sm:$0xff]
  %v28 = vld [vmem:[%s0 + $0x88] sm:$0xff]
  %v29 = vld [vmem:[%s0 + $0x90] sm:$0xff]
  %v30 = vld [vmem:[%s0 + $0x98] sm:$0xff]
  %v31 = vld [vmem:[%s0 + $0xa0] sm:$0xff]
  %v32 = vld [vmem:[%s0 + $0xa8] sm:$0xff]
  %v33 = vld [vmem:[%s0 + $0xb0] sm:$0xff]
  %v34 = vld [vmem:[%s0 + $0xb8] sm:$0xff]
  %v35 = vld [vmem:[%s0 + $0xc0] sm:$0xff]
  %v36 = vld [vmem:[%s0 + $0xc8] sm:$0xff]
  %v37 = vld [vmem:[%s0 + $0xd0] sm:$0xff]
  %v38 = vld [vmem:[%s0 + $0xd8] sm:$0xff]
  %v39 = vld [vmem:[%s0 + $0xe0] sm:$0xff]
  %v40 = vld [vmem:[%s0 + $0xe8] sm:$0xff]
  %v41 = vld [vmem:[%s0 + $0xf0] sm:$0xff]
  %v42 = vld [vmem:[%s0 + $0xf8] sm:$0xff]
  %v43 = vld [vmem:[%s1] sm:$0xff]
  %v44 = vld [vmem:[%s1 + $0x8] sm:$0xff]
  %v45 = vld [vmem:[%s1 + $0x10] sm:$0xff]
  %v46 = vld [vmem:[%s1 + $0x18] sm:$0xff]
  %vm47 = vcmask 261120
  %v49 = vsel %vm47, %v11, 0
  %v52 = vsel %vm47, %v12, 0
  %v55 = vsel %vm47, %v13, 0
  %v58 = vsel %vm47, %v14, 0
  %v61 = vsel %vm47, %v15, 0
  %v64 = vsel %vm47, %v16, 0
  %v67 = vsel %vm47, %v17, 0
  %v70 = vsel %vm47, %v18, 0
  %v73 = vsel %vm47, %v19, 0
  %v76 = vsel %vm47, %v20, 0
  %v79 = vsel %vm47, %v21, 0
  %v82 = vsel %vm47, %v22, 0
  %v85 = vsel %vm47, %v23, 0
  %v88 = vsel %vm47, %v24, 0
  %v91 = vsel %vm47, %v25, 0
  %v94 = vsel %vm47, %v26, 0
  %v97 = vsel %vm47, %v27, 0
  %v100 = vsel %vm47, %v28, 0
  %v103 = vsel %vm47, %v29, 0
  %v106 = vsel %vm47, %v30, 0
  %v109 = vsel %vm47, %v31, 0
  %v112 = vsel %vm47, %v32, 0
  %v115 = vsel %vm47, %v33, 0
  %v118 = vsel %vm47, %v34, 0
  %v121 = vsel %vm47, %v35, 0
  %v124 = vsel %vm47, %v36, 0
  %v127 = vsel %vm47, %v37, 0
  %v130 = vsel %vm47, %v38, 0
  %v133 = vsel %vm47, %v39, 0
  %v136 = vsel %vm47, %v40, 0
  %v139 = vsel %vm47, %v41, 0
  %v142 = vsel %vm47, %v42, 0
  %144 = vmatprep.subr.mxu0 0.0
  %145 = vmatpush1.msra.mxu0 0.0
  %146 = vmatprep.subr.mxu0 0.0
  %147 = vmatpush1.msra.mxu0 0.0
  %148 = vmatprep.subr.mxu0 0.0
  %149 = vmatpush1.msra.mxu0 0.0
  %150 = vmatprep.subr.mxu0 0.0
  %151 = vmatpush1.msra.mxu0 0.0
  %152 = vmatprep.subr.mxu0 0.0
  %153 = vmatpush1.msra.mxu0 0.0
  %154 = vmatprep.subr.mxu0 0.0
  %155 = vmatpush1.msra.mxu0 0.0
  %156 = vmatprep.subr.mxu0 0.0
  %157 = vmatpush1.msra.mxu0 0.0
  %158 = vmatprep.subr.mxu0 0.0
  %159 = vmatpush1.msra.mxu0 0.0
  %160 = vmatprep.subr.mxu0 0.0
  %161 = vmatpush1.msra.mxu0 0.0
  %162 = vmatprep.subr.mxu0 0.0
  %163 = vmatpush1.msra.mxu0 0.0
  %164 = vmatprep.subr.mxu0 0.0
  %165 = vmatpush1.msra.mxu0 0.0
  %166 = vmatprep.subr.mxu0 0.0
  %167 = vmatpush1.msra.mxu0 0.0
  %168 = vmatprep.subr.mxu0 0.0
  %169 = vmatpush1.msra.mxu0 %v46
  %170 = vmatprep.subr.mxu0 0.0
  %171 = vmatpush1.msra.mxu0 %v45
  %172 = vmatprep.subr.mxu0 0.0
  %173 = vmatpush1.msra.mxu0 %v44
  %174 = vmatprep.subr.mxu0 0.0
  %175 = vmatpush1.msra.mxu0 %v43
  %176 = vmatprep.subr.mxu0 0.0
  %177 = vmatpush2.msra.mxu0 0.0
  %178 = vmatprep.subr.mxu0 0.0
  %179 = vmatpush2.msra.mxu0 0.0
  %180 = vmatprep.subr.mxu0 0.0
  %181 = vmatpush2.msra.mxu0 0.0
  %182 = vmatprep.subr.mxu0 0.0
  %183 = vmatpush2.msra.mxu0 0.0
  %184 = vmatprep.subr.mxu0 0.0
  %185 = vmatpush2.msra.mxu0 0.0
  %186 = vmatprep.subr.mxu0 0.0
  %187 = vmatpush2.msra.mxu0 0.0
  %188 = vmatprep.subr.mxu0 0.0
  %189 = vmatpush2.msra.mxu0 0.0
  %190 = vmatprep.subr.mxu0 0.0
  %191 = vmatpush2.msra.mxu0 0.0
  %192 = vmatprep.subr.mxu0 0.0
  %193 = vmatpush2.msra.mxu0 0.0
  %194 = vmatprep.subr.mxu0 0.0
  %195 = vmatpush2.msra.mxu0 0.0
  %196 = vmatprep.subr.mxu0 0.0
  %197 = vmatpush2.msra.mxu0 0.0
  %198 = vmatprep.subr.mxu0 0.0
  %199 = vmatpush2.msra.mxu0 0.0
  %200 = vmatprep.subr.mxu0 0.0
  %201 = vmatpush2.msra.mxu0 0.0
  %202 = vmatprep.subr.mxu0 0.0
  %203 = vmatpush2.msra.mxu0 0.0
  %204 = vmatprep.subr.mxu0 0.0
  %205 = vmatpush2.msra.mxu0 0.0
  %206 = vmatprep.subr.mxu0 0.0
  %207 = vmatpush2.msra.mxu0 0.0
  %208 = vmatprep.mubr.f32.mxu0 0.0
  %209 = vmatmul.mubr.f32.gmra.mxu0 %v49
  %v210 = vpop.f32.mrf.mxu0
  %v211 = vadd.f32 0.0, %v210
  %v212 = vpop.f32.mrf.mxu0
  %213 = vmatprep.mubr.f32.mxu0 0.0
  %214 = vmatmul.mubr.f32.gmra.mxu0 %v52
  %v215 = vpop.f32.mrf.mxu0
  %v216 = vadd.f32 0.0, %v215
  %v217 = vpop.f32.mrf.mxu0
  %218 = vmatprep.mubr.f32.mxu0 0.0
  %219 = vmatmul.mubr.f32.gmra.mxu0 %v55
  %v220 = vpop.f32.mrf.mxu0
  %v221 = vadd.f32 0.0, %v220
  %v222 = vpop.f32.mrf.mxu0
  %223 = vmatprep.mubr.f32.mxu0 0.0
  %224 = vmatmul.mubr.f32.gmra.mxu0 %v58
  %v225 = vpop.f32.mrf.mxu0
  %v226 = vadd.f32 0.0, %v225
  %v227 = vpop.f32.mrf.mxu0
  %228 = vmatprep.mubr.f32.mxu0 0.0
  %229 = vmatmul.mubr.f32.gmra.mxu0 %v61
  %v230 = vpop.f32.mrf.mxu0
  %v231 = vadd.f32 0.0, %v230
  %v232 = vpop.f32.mrf.mxu0
  %233 = vmatprep.mubr.f32.mxu0 0.0
  %234 = vmatmul.mubr.f32.gmra.mxu0 %v64
  %v235 = vpop.f32.mrf.mxu0
  %v236 = vadd.f32 0.0, %v235
  %v237 = vpop.f32.mrf.mxu0
  %238 = vmatprep.mubr.f32.mxu0 0.0
  %239 = vmatmul.mubr.f32.gmra.mxu0 %v67
  %v240 = vpop.f32.mrf.mxu0
  %v241 = vadd.f32 0.0, %v240
  %v242 = vpop.f32.mrf.mxu0
  %243 = vmatprep.mubr.f32.mxu0 0.0
  %244 = vmatmul.mubr.f32.gmra.mxu0 %v70
  %v245 = vpop.f32.mrf.mxu0
  %v246 = vadd.f32 0.0, %v245
  %v247 = vpop.f32.mrf.mxu0
  %248 = vmatprep.mubr.f32.mxu0 0.0
  %249 = vmatmul.mubr.f32.gmra.mxu0 %v73
  %v250 = vpop.f32.mrf.mxu0
  %v251 = vadd.f32 0.0, %v250
  %v252 = vpop.f32.mrf.mxu0
  %253 = vmatprep.mubr.f32.mxu0 0.0
  %254 = vmatmul.mubr.f32.gmra.mxu0 %v76
  %v255 = vpop.f32.mrf.mxu0
  %v256 = vadd.f32 0.0, %v255
  %v257 = vpop.f32.mrf.mxu0
  %258 = vmatprep.mubr.f32.mxu0 0.0
  %259 = vmatmul.mubr.f32.gmra.mxu0 %v79
  %v260 = vpop.f32.mrf.mxu0
  %v261 = vadd.f32 0.0, %v260
  %v262 = vpop.f32.mrf.mxu0
  %263 = vmatprep.mubr.f32.mxu0 0.0
  %264 = vmatmul.mubr.f32.gmra.mxu0 %v82
  %v265 = vpop.f32.mrf.mxu0
  %v266 = vadd.f32 0.0, %v265
  %v267 = vpop.f32.mrf.mxu0
  %268 = vmatprep.mubr.f32.mxu0 0.0
  %269 = vmatmul.mubr.f32.gmra.mxu0 %v85
  %v270 = vpop.f32.mrf.mxu0
  %v271 = vadd.f32 0.0, %v270
  %v272 = vpop.f32.mrf.mxu0
  %273 = vmatprep.mubr.f32.mxu0 0.0
  %274 = vmatmul.mubr.f32.gmra.mxu0 %v88
  %v275 = vpop.f32.mrf.mxu0
  %v276 = vadd.f32 0.0, %v275
  %v277 = vpop.f32.mrf.mxu0
  %278 = vmatprep.mubr.f32.mxu0 0.0
  %279 = vmatmul.mubr.f32.gmra.mxu0 %v91
  %v280 = vpop.f32.mrf.mxu0
  %v281 = vadd.f32 0.0, %v280
  %v282 = vpop.f32.mrf.mxu0
  %283 = vmatprep.mubr.f32.mxu0 0.0
  %284 = vmatmul.mubr.f32.gmra.mxu0 %v94
  %v285 = vpop.f32.mrf.mxu0
  %v286 = vadd.f32 0.0, %v285
  %v287 = vpop.f32.mrf.mxu0
  %288 = vmatprep.mubr.f32.mxu0 0.0
  %289 = vmatmul.mubr.f32.gmra.mxu0 %v97
  %v290 = vpop.f32.mrf.mxu0
  %v291 = vadd.f32 0.0, %v290
  %v292 = vpop.f32.mrf.mxu0
  %293 = vmatprep.mubr.f32.mxu0 0.0
  %294 = vmatmul.mubr.f32.gmra.mxu0 %v100
  %v295 = vpop.f32.mrf.mxu0
  %v296 = vadd.f32 0.0, %v295
  %v297 = vpop.f32.mrf.mxu0
  %298 = vmatprep.mubr.f32.mxu0 0.0
  %299 = vmatmul.mubr.f32.gmra.mxu0 %v103
  %v300 = vpop.f32.mrf.mxu0
  %v301 = vadd.f32 0.0, %v300
  %v302 = vpop.f32.mrf.mxu0
  %303 = vmatprep.mubr.f32.mxu0 0.0
  %304 = vmatmul.mubr.f32.gmra.mxu0 %v106
  %v305 = vpop.f32.mrf.mxu0
  %v306 = vadd.f32 0.0, %v305
  %v307 = vpop.f32.mrf.mxu0
  %308 = vmatprep.mubr.f32.mxu0 0.0
  %309 = vmatmul.mubr.f32.gmra.mxu0 %v109
  %v310 = vpop.f32.mrf.mxu0
  %v311 = vadd.f32 0.0, %v310
  %v312 = vpop.f32.mrf.mxu0
  %313 = vmatprep.mubr.f32.mxu0 0.0
  %314 = vmatmul.mubr.f32.gmra.mxu0 %v112
  %v315 = vpop.f32.mrf.mxu0
  %v316 = vadd.f32 0.0, %v315
  %v317 = vpop.f32.mrf.mxu0
  %318 = vmatprep.mubr.f32.mxu0 0.0
  %319 = vmatmul.mubr.f32.gmra.mxu0 %v115
  %v320 = vpop.f32.mrf.mxu0
  %v321 = vadd.f32 0.0, %v320
  %v322 = vpop.f32.mrf.mxu0
  %323 = vmatprep.mubr.f32.mxu0 0.0
  %324 = vmatmul.mubr.f32.gmra.mxu0 %v118
  %v325 = vpop.f32.mrf.mxu0
  %v326 = vadd.f32 0.0, %v325
  %v327 = vpop.f32.mrf.mxu0
  %328 = vmatprep.mubr.f32.mxu0 0.0
  %329 = vmatmul.mubr.f32.gmra.mxu0 %v121
  %v330 = vpop.f32.mrf.mxu0
  %v331 = vadd.f32 0.0, %v330
  %v332 = vpop.f32.mrf.mxu0
  %333 = vmatprep.mubr.f32.mxu0 0.0
  %334 = vmatmul.mubr.f32.gmra.mxu0 %v124
  %v335 = vpop.f32.mrf.mxu0
  %v336 = vadd.f32 0.0, %v335
  %v337 = vpop.f32.mrf.mxu0
  %338 = vmatprep.mubr.f32.mxu0 0.0
  %339 = vmatmul.mubr.f32.gmra.mxu0 %v127
  %v340 = vpop.f32.mrf.mxu0
  %v341 = vadd.f32 0.0, %v340
  %v342 = vpop.f32.mrf.mxu0
  %343 = vmatprep.mubr.f32.mxu0 0.0
  %344 = vmatmul.mubr.f32.gmra.mxu0 %v130
  %v345 = vpop.f32.mrf.mxu0
  %v346 = vadd.f32 0.0, %v345
  %v347 = vpop.f32.mrf.mxu0
  %348 = vmatprep.mubr.f32.mxu0 0.0
  %349 = vmatmul.mubr.f32.gmra.mxu0 %v133
  %v350 = vpop.f32.mrf.mxu0
  %v351 = vadd.f32 0.0, %v350
  %v352 = vpop.f32.mrf.mxu0
  %353 = vmatprep.mubr.f32.mxu0 0.0
  %354 = vmatmul.mubr.f32.gmra.mxu0 %v136
  %v355 = vpop.f32.mrf.mxu0
  %v356 = vadd.f32 0.0, %v355
  %v357 = vpop.f32.mrf.mxu0
  %358 = vmatprep.mubr.f32.mxu0 0.0
  %359 = vmatmul.mubr.f32.gmra.mxu0 %v139
  %v360 = vpop.f32.mrf.mxu0
  %v361 = vadd.f32 0.0, %v360
  %v362 = vpop.f32.mrf.mxu0
  %363 = vmatprep.mubr.f32.mxu0 0.0
  %364 = vmatmul.mubr.f32.gmra.mxu0 %v142
  %v365 = vpop.f32.mrf.mxu0
  %v366 = vadd.f32 0.0, %v365
  %v367 = vpop.f32.mrf.mxu0
  %368 = vdwg.mxu0
  %369 = vst [vmem:[%s2] sm:$0xff] %v211
  %370 = vst [vmem:[%s2 + $0x8] sm:$0xff] %v216
  %371 = vst [vmem:[%s2 + $0x10] sm:$0xff] %v221
  %372 = vst [vmem:[%s2 + $0x18] sm:$0xff] %v226
  %373 = vst [vmem:[%s2 + $0x20] sm:$0xff] %v231
  %374 = vst [vmem:[%s2 + $0x28] sm:$0xff] %v236
  %375 = vst [vmem:[%s2 + $0x30] sm:$0xff] %v241
  %376 = vst [vmem:[%s2 + $0x38] sm:$0xff] %v246
  %377 = vst [vmem:[%s2 + $0x40] sm:$0xff] %v251
  %378 = vst [vmem:[%s2 + $0x48] sm:$0xff] %v256
  %379 = vst [vmem:[%s2 + $0x50] sm:$0xff] %v261
  %380 = vst [vmem:[%s2 + $0x58] sm:$0xff] %v266
  %381 = vst [vmem:[%s2 + $0x60] sm:$0xff] %v271
  %382 = vst [vmem:[%s2 + $0x68] sm:$0xff] %v276
  %383 = vst [vmem:[%s2 + $0x70] sm:$0xff] %v281
  %384 = vst [vmem:[%s2 + $0x78] sm:$0xff] %v286
  %385 = vst [vmem:[%s2 + $0x80] sm:$0xff] %v291
  %386 = vst [vmem:[%s2 + $0x88] sm:$0xff] %v296
  %387 = vst [vmem:[%s2 + $0x90] sm:$0xff] %v301
  %388 = vst [vmem:[%s2 + $0x98] sm:$0xff] %v306
  %389 = vst [vmem:[%s2 + $0xa0] sm:$0xff] %v311
  %390 = vst [vmem:[%s2 + $0xa8] sm:$0xff] %v316
  %391 = vst [vmem:[%s2 + $0xb0] sm:$0xff] %v321
  %392 = vst [vmem:[%s2 + $0xb8] sm:$0xff] %v326
  %393 = vst [vmem:[%s2 + $0xc0] sm:$0xff] %v331
  %394 = vst [vmem:[%s2 + $0xc8] sm:$0xff] %v336
  %395 = vst [vmem:[%s2 + $0xd0] sm:$0xff] %v341
  %396 = vst [vmem:[%s2 + $0xd8] sm:$0xff] %v346
  %397 = vst [vmem:[%s2 + $0xe0] sm:$0xff] %v351
  %398 = vst [vmem:[%s2 + $0xe8] sm:$0xff] %v356
  %399 = vst [vmem:[%s2 + $0xf0] sm:$0xff] %v361
  %400 = vst [vmem:[%s2 + $0xf8] sm:$0xff] %v366
  // Predicated region
  $region10: #{gcn_forward.2} parent=0 // pred_check
    _
  $region11: #{gcn_forward.2} parent=0 // pred_check_branch
    %402 = sbr.rel (0) target = $region13
  $region12: #{gcn_forward.2} parent=0 // pred_region
    _
  $region13: #{gcn_forward.2} parent=0 // pred_fallthru
    _
  // Predicated region
  $region14: #{gcn_forward.2} parent=0 // pred_check
    _
  $region15: #{gcn_forward.2} parent=0 // pred_check_branch
    %404 = sbr.rel (0) target = $region17
  $region16: #{gcn_forward.2} parent=0 // pred_region
    _
  $region17: #{gcn_forward.2} parent=0 // pred_fallthru
    _

// kernel: gcn_forward.3
$region0: #{gcn_forward.3}
  #allocation0 [shape = 'u32[]', space=smem, size = 0x4, offset = 0x4, fixed_abs, tag = 'smem constant byte address 0x4 - core index']
  #allocation1 [shape = 'u32[144,128]{1,0:T(1,128)}', space=vmem, size = 0x12000, scoped, tag = 'internal scratch']
  #allocation2 [shape = 'f32[128,128]{1,0:T(8,128)}', space=vmem, size = 0x10000, scoped, tag = 'scratch operand']
  %s0 = inlined_call_operand.vmem [shape: f32[2,128,128], index: 0, kind: input, shape index: {}]
  %s1 = inlined_call_operand.vmem [shape: f32[2,128,128], index: 1, kind: input, shape index: {}]
  %s2 = inlined_call_operand.vmem [shape: f32[1,128], index: 2, kind: input, shape index: {}]
  %s3 = inlined_call_operand.vmem [shape: f32[2,128,128], index: 3, kind: output, shape index: {}]
  %s4 = sld [smem:[#allocation0]]
  $region53: #{gcn_forward.3} parent=0
    _
  %s6 = ssub.s32 1, %s4
  %s7 = scalar_select 0, %s6, %s4
  loop: start=0, step=1, limit=4
  $region2: #{gcn_forward.3} parent=0 // loop_pre_header
    _
  $region3: #{gcn_forward.3} parent=0 // loop_header
    %s9 = sphi 0, %s13
    %p10 = scmp.ge.s32.totalorder %s9, 4
    %s16 = sphi 0, %s35
    %s17 = sphi 0, %s31
    %s18 = sphi 0, %s27
    %s19 = sphi 0, %s16
    %s20 = sphi 0, %s17
    %s21 = sphi 0, %s18
    %s22 = sphi 0, %s19
    %s23 = sphi 0, %s20
    %s24 = sphi 0, %s21
    %s42 = sphi 0, %s44
    %s45 = sphi 0, %s42
    %s46 = sphi 0, %s45
    %s62 = sphi 0, %s46
    %s70 = sphi 0, %s72
    %s73 = sphi 0, %s70
    %s74 = sphi 0, %s73
    %s90 = sphi 0, %s74
    %s94 = sphi 0, %s94
    %s96 = sphi 0, %s94
    %s97 = sphi 0, %s96
    %s111 = sphi 0, %s97
    %s119 = sphi 0, %s121
    %s122 = sphi 0, %s119
    %s123 = sphi 0, %s122
    %s139 = sphi 0, %s123
  $region4: #{gcn_forward.3} parent=0 // loop_header_branch
    %12 = sbr.rel (%p10) target = $region8
  $region5: #{gcn_forward.3} parent=0 // loop_body
    %s14 = ssub.s32 %s9, 1
    %s15 = ssub.s32 %s9, 2
    %s25 = sadd.s32 1, %s18
    %p26 = scmp.ge.s32.totalorder %s25, 1
    %s27 = scalar_select %p26, 0, %s25
    %s28 = sadd.s32 1, %s17
    %s29 = scalar_select %p26, %s28, %s17
    %p30 = scmp.ge.s32.totalorder %s29, 1
    %s31 = scalar_select %p30, 0, %s29
    %s32 = sadd.s32 1, %s16
    %s33 = scalar_select %p30, %s32, %s16
    %p34 = scmp.ge.s32.totalorder %s33, 2
    %s35 = scalar_select %p34, 0, %s33
    %s36 = ssub.s32 %s16, %s35
    %s37 = ssub.s32 %s17, %s31
    %s38 = sor.u32 %s36, %s37
    %s39 = ssub.s32 %s18, %s27
    %s40 = sor.u32 %s38, %s39
    %p41 = scmp.eq.s32.totalorder %s40, 0
    %s43 = sadd.s32 %s42, 1
    %s44 = scalar_select %p41, %s42, %s43
    %p47 = pneg %p41
    %p48 = scmp.eq.s32.totalorder %s9, 1
    %p49 = por %p47, %p48
    %p50 = scmp.ne.s32.totalorder %s42, %s45
    %p51 = scmp.eq.s32.totalorder %s9, 0
    %p52 = por %p50, %p51
    %p53 = scmp.ne.s32.totalorder %s42, %s45
    %p54 = scmp.eq.s32.totalorder %s14, 1
    %p55 = por %p53, %p54
    %p56 = scmp.ne.s32.totalorder %s45, %s46
    %p57 = scmp.eq.s32.totalorder %s14, 0
    %p58 = por %p56, %p57
    %p59 = scmp.ne.s32.totalorder %s45, %s46
    %p60 = scmp.eq.s32.totalorder %s15, 1
    %p61 = por %p59, %p60
    %p63 = scmp.ne.s32.totalorder %s46, %s62
    %p64 = scmp.eq.s32.totalorder %s15, 0
    %p65 = por %p63, %p64
    %s66 = ssub.s32 %s16, %s35
    %s67 = ssub.s32 %s18, %s27
    %s68 = sor.u32 %s66, %s67
    %p69 = scmp.eq.s32.totalorder %s68, 0
    %s71 = sadd.s32 %s70, 1
    %s72 = scalar_select %p69, %s70, %s71
    %p75 = pneg %p69
    %p76 = scmp.eq.s32.totalorder %s9, 1
    %p77 = por %p75, %p76
    %p78 = scmp.ne.s32.totalorder %s70, %s73
    %p79 = scmp.eq.s32.totalorder %s9, 0
    %p80 = por %p78, %p79
    %p81 = scmp.ne.s32.totalorder %s70, %s73
    %p82 = scmp.eq.s32.totalorder %s14, 1
    %p83 = por %p81, %p82
    %p84 = scmp.ne.s32.totalorder %s73, %s74
    %p85 = scmp.eq.s32.totalorder %s14, 0
    %p86 = por %p84, %p85
    %p87 = scmp.ne.s32.totalorder %s73, %s74
    %p88 = scmp.eq.s32.totalorder %s15, 1
    %p89 = por %p87, %p88
    %p91 = scmp.ne.s32.totalorder %s74, %s90
    %p92 = scmp.eq.s32.totalorder %s15, 0
    %p93 = por %p91, %p92
    %s95 = sadd.s32 %s94, 1
    %p98 = scmp.eq.s32.totalorder %s9, 1
    %p99 = scmp.ne.s32.totalorder %s94, %s96
    %p100 = scmp.eq.s32.totalorder %s9, 0
    %p101 = por %p99, %p100
    %p102 = scmp.ne.s32.totalorder %s94, %s96
    %p103 = scmp.eq.s32.totalorder %s14, 1
    %p104 = por %p102, %p103
    %p105 = scmp.ne.s32.totalorder %s96, %s97
    %p106 = scmp.eq.s32.totalorder %s14, 0
    %p107 = por %p105, %p106
    %p108 = scmp.ne.s32.totalorder %s96, %s97
    %p109 = scmp.eq.s32.totalorder %s15, 1
    %p110 = por %p108, %p109
    %p112 = scmp.ne.s32.totalorder %s97, %s111
    %p113 = scmp.eq.s32.totalorder %s15, 0
    %p114 = por %p112, %p113
    %s115 = ssub.s32 %s16, %s35
    %s116 = ssub.s32 %s17, %s31
    %s117 = sor.u32 %s115, %s116
    %p118 = scmp.eq.s32.totalorder %s117, 0
    %s120 = sadd.s32 %s119, 1
    %s121 = scalar_select %p118, %s119, %s120
    %p124 = pneg %p118
    %p125 = scmp.eq.s32.totalorder %s9, 1
    %p126 = por %p124, %p125
    %p127 = scmp.ne.s32.totalorder %s119, %s122
    %p128 = scmp.eq.s32.totalorder %s9, 0
    %p129 = por %p127, %p128
    %p130 = scmp.ne.s32.totalorder %s119, %s122
    %p131 = scmp.eq.s32.totalorder %s14, 1
    %p132 = por %p130, %p131
    %p133 = scmp.ne.s32.totalorder %s122, %s123
    %p134 = scmp.eq.s32.totalorder %s14, 0
    %p135 = por %p133, %p134
    %p136 = scmp.ne.s32.totalorder %s122, %s123
    %p137 = scmp.eq.s32.totalorder %s15, 1
    %p138 = por %p136, %p137
    %p140 = scmp.ne.s32.totalorder %s123, %s139
    %p141 = scmp.eq.s32.totalorder %s15, 0
    %p142 = por %p140, %p141
    %p143 = scmp.le.s32.totalorder 1, %s9
    %p144 = scmp.lt.s32.totalorder %s9, 3
    %p145 = pnand %p143, %p144
    %p146 = pneg %p145
    // Predicated region
    $region9: #{gcn_forward.3} parent=5 // pred_check
      _
    $region10: #{gcn_forward.3} parent=5 // pred_check_branch
      %148 = sbr.rel (%p145) target = $region12
    $region11: #{gcn_forward.3} parent=5 // pred_region
      %s149 = ssub.s32 %s9, 1
      // Predicated region
      $region13: #{gcn_forward.3} parent=11 // pred_check
        %p150 = pneg %p107
      $region14: #{gcn_forward.3} parent=11 // pred_check_branch
        %152 = sbr.rel (%p150) target = $region16
      $region15: #{gcn_forward.3} parent=11 // pred_region
        _
      $region16: #{gcn_forward.3} parent=11 // pred_fallthru
        _
    $region12: #{gcn_forward.3} parent=5 // pred_fallthru
      _
    %p153 = scmp.lt.s32.totalorder %s9, 2
    // Predicated region
    $region17: #{gcn_forward.3} parent=5 // pred_check
      %p154 = pneg %p153
    $region18: #{gcn_forward.3} parent=5 // pred_check_branch
      %156 = sbr.rel (%p154) target = $region20
    $region19: #{gcn_forward.3} parent=5 // pred_region
      // Predicated region
      $region21: #{gcn_forward.3} parent=19 // pred_check
        %p157 = pneg %p52
      $region22: #{gcn_forward.3} parent=19 // pred_check_branch
        %159 = sbr.rel (%p157) target = $region24
      $region23: #{gcn_forward.3} parent=19 // pred_region
        %s160 = smul.u32 16, %s17
        %p161 = scmp.lt.s32.totalorder %s16, 1
        %s162 = scalar_select %p161, %s16, 1
        %p163 = scmp.lt.s32.totalorder %s160, 15
        %s164 = scalar_select %p163, %s160, 15
        %p165 = scmp.lt.s32.totalorder %s18, 0
        %s166 = scalar_select %p165, %s18, 0
        %s167 = sadd.s32 %s166, %s164
        %s168 = smul.addr %s162, 16
        %s169 = sadd.s32 %s167, %s168
        %s170 = smul.addr %s169, 8
        %s171 = scalar_lea.vmem %s0, %s170
        %s172 = smul.u32 16, %s17
      $region24: #{gcn_forward.3} parent=19 // pred_fallthru
        _
      // Predicated region
      $region25: #{gcn_forward.3} parent=19 // pred_check
        %p173 = pneg %p80
      $region26: #{gcn_forward.3} parent=19 // pred_check_branch
        %175 = sbr.rel (%p173) target = $region28
      $region27: #{gcn_forward.3} parent=19 // pred_region
        %s176 = smul.u32 16, %s18
        %p177 = scmp.lt.s32.totalorder %s16, 1
        %s178 = scalar_select %p177, %s16, 1
        %p179 = scmp.lt.s32.totalorder %s176, 15
        %s180 = scalar_select %p179, %s176, 15
        %s181 = smul.addr %s178, 16
        %s182 = sadd.s32 %s180, %s181
        %s183 = smul.addr %s182, 8
        %s184 = scalar_lea.vmem %s1, %s183
        %s185 = smul.u32 16, %s18
      $region28: #{gcn_forward.3} parent=19 // pred_fallthru
        _
    $region20: #{gcn_forward.3} parent=5 // pred_fallthru
      _
    %p186 = scmp.le.s32.totalorder 1, %s9
    %p187 = scmp.lt.s32.totalorder %s9, 3
    %p188 = pnand %p186, %p187
    %p189 = pneg %p188
    // Predicated region
    $region29: #{gcn_forward.3} parent=5 // pred_check
      _
    $region30: #{gcn_forward.3} parent=5 // pred_check_branch
      %191 = sbr.rel (%p188) target = $region32
    $region31: #{gcn_forward.3} parent=5 // pred_region
      %s192 = ssub.s32 %s9, 1
      %s193 = smul.u32 16, %s20
      %p194 = scmp.lt.s32.totalorder %s19, 1
      %s195 = scalar_select %p194, %s19, 1
      %p196 = scmp.lt.s32.totalorder %s193, 15
      %s197 = scalar_select %p196, %s193, 15
      %p198 = scmp.lt.s32.totalorder %s21, 0
      %s199 = scalar_select %p198, %s21, 0
      %s200 = sadd.s32 %s199, %s197
      %s201 = smul.addr %s195, 16
      %s202 = sadd.s32 %s200, %s201
      %s203 = smul.addr %s202, 8
      %s204 = scalar_lea.vmem %s0, %s203
      %p205 = pneg %p58
      %p206 = pneg %p55
      %s207 = smul.u32 16, %s21
      %p208 = scmp.lt.s32.totalorder %s19, 1
      %s209 = scalar_select %p208, %s19, 1
      %p210 = scmp.lt.s32.totalorder %s207, 15
      %s211 = scalar_select %p210, %s207, 15
      %s212 = smul.addr %s209, 16
      %s213 = sadd.s32 %s211, %s212
      %s214 = smul.addr %s213, 8
      %s215 = scalar_lea.vmem %s1, %s214
      %p216 = pneg %p86
      %p217 = pneg %p83
      %p218 = pneg %p107
      %p219 = pneg %p104
      %p220 = pneg %p135
      %p221 = pneg %p132
      %s222 = smul.u32 16, %s20
      %p223 = scmp.lt.s32.totalorder %s19, 1
      %s224 = scalar_select %p223, %s19, 1
      %p225 = scmp.lt.s32.totalorder %s222, 15
      %s226 = scalar_select %p225, %s222, 15
      %s227 = smul.addr %s224, 16
      %s228 = sadd.s32 %s226, %s227
      %s229 = smul.addr %s228, 8
      %s230 = scalar_lea.vmem %s3, %s229
      %s231 = smul.u32 16, %s20
      %p232 = scmp.lt.s32.totalorder %s19, 1
      %s233 = scalar_select %p232, %s19, 1
      %p234 = scmp.lt.s32.totalorder %s231, 15
      %s235 = scalar_select %p234, %s231, 15
      %p236 = scmp.lt.s32.totalorder %s21, 0
      %s237 = scalar_select %p236, %s21, 0
      %s238 = sadd.s32 %s237, %s235
      %s239 = smul.addr %s233, 16
      %s240 = sadd.s32 %s238, %s239
      %s241 = smul.addr %s240, 8
      %s242 = scalar_lea.vmem %s0, %s241
      %s243 = smul.u32 16, %s20
      %s244 = smul.u32 16, %s21
      %p245 = scmp.lt.s32.totalorder %s19, 1
      %s246 = scalar_select %p245, %s19, 1
      %p247 = scmp.lt.s32.totalorder %s244, 15
      %s248 = scalar_select %p247, %s244, 15
      %s249 = smul.addr %s246, 16
      %s250 = sadd.s32 %s248, %s249
      %s251 = smul.addr %s250, 8
      %s252 = scalar_lea.vmem %s1, %s251
      %s253 = smul.u32 16, %s21
      %s254 = smul.u32 16, %s20
      %p255 = scmp.lt.s32.totalorder %s19, 1
      %s256 = scalar_select %p255, %s19, 1
      %p257 = scmp.lt.s32.totalorder %s254, 15
      %s258 = scalar_select %p257, %s254, 15
      %s259 = smul.addr %s256, 16
      %s260 = sadd.s32 %s258, %s259
      %s261 = smul.addr %s260, 8
      %s262 = scalar_lea.vmem %s3, %s261
      %s263 = smul.u32 16, %s20
      %p264 = scmp.eq.s32.totalorder %s21, 0
      // Predicated region
      $region33: #{gcn_forward.3} parent=31 // pred_check
        %p265 = pneg %p264
      $region34: #{gcn_forward.3} parent=31 // pred_check_branch
        %267 = sbr.rel (%p265) target = $region36
      $region35: #{gcn_forward.3} parent=31 // pred_region
        %268 = vst [vmem:[#allocation2] sm:$0xff] 0.0
        %269 = vst [vmem:[#allocation2 + $0x8] sm:$0xff] 0.0
        %270 = vst [vmem:[#allocation2 + $0x10] sm:$0xff] 0.0
        %271 = vst [vmem:[#allocation2 + $0x18] sm:$0xff] 0.0
        %272 = vst [vmem:[#allocation2 + $0x20] sm:$0xff] 0.0
        %273 = vst [vmem:[#allocation2 + $0x28] sm:$0xff] 0.0
        %274 = vst [vmem:[#allocation2 + $0x30] sm:$0xff] 0.0
        %275 = vst [vmem:[#allocation2 + $0x38] sm:$0xff] 0.0
        %276 = vst [vmem:[#allocation2 + $0x40] sm:$0xff] 0.0
        %277 = vst [vmem:[#allocation2 + $0x48] sm:$0xff] 0.0
        %278 = vst [vmem:[#allocation2 + $0x50] sm:$0xff] 0.0
        %279 = vst [vmem:[#allocation2 + $0x58] sm:$0xff] 0.0
        %280 = vst [vmem:[#allocation2 + $0x60] sm:$0xff] 0.0
        %281 = vst [vmem:[#allocation2 + $0x68] sm:$0xff] 0.0
        %282 = vst [vmem:[#allocation2 + $0x70] sm:$0xff] 0.0
        %283 = vst [vmem:[#allocation2 + $0x78] sm:$0xff] 0.0
      $region36: #{gcn_forward.3} parent=31 // pred_fallthru
        _
      %v284 = vld [vmem:[#allocation2] sm:$0xff]
      %v285 = vld [vmem:[#allocation2 + $0x8] sm:$0xff]
      %v286 = vld [vmem:[#allocation2 + $0x10] sm:$0xff]
      %v287 = vld [vmem:[#allocation2 + $0x18] sm:$0xff]
      %v288 = vld [vmem:[#allocation2 + $0x20] sm:$0xff]
      %v289 = vld [vmem:[#allocation2 + $0x28] sm:$0xff]
      %v290 = vld [vmem:[#allocation2 + $0x30] sm:$0xff]
      %v291 = vld [vmem:[#allocation2 + $0x38] sm:$0xff]
      %v292 = vld [vmem:[#allocation2 + $0x40] sm:$0xff]
      %v293 = vld [vmem:[#allocation2 + $0x48] sm:$0xff]
      %v294 = vld [vmem:[#allocation2 + $0x50] sm:$0xff]
      %v295 = vld [vmem:[#allocation2 + $0x58] sm:$0xff]
      %v296 = vld [vmem:[#allocation2 + $0x60] sm:$0xff]
      %v297 = vld [vmem:[#allocation2 + $0x68] sm:$0xff]
      %v298 = vld [vmem:[#allocation2 + $0x70] sm:$0xff]
      %v299 = vld [vmem:[#allocation2 + $0x78] sm:$0xff]
      %v300 = vld [vmem:[%s242] sm:$0xff]
      %v301 = vld [vmem:[%s242 + $0x8] sm:$0xff]
      %v302 = vld [vmem:[%s242 + $0x10] sm:$0xff]
      %v303 = vld [vmem:[%s242 + $0x18] sm:$0xff]
      %v304 = vld [vmem:[%s242 + $0x20] sm:$0xff]
      %v305 = vld [vmem:[%s242 + $0x28] sm:$0xff]
      %v306 = vld [vmem:[%s242 + $0x30] sm:$0xff]
      %v307 = vld [vmem:[%s242 + $0x38] sm:$0xff]
      %v308 = vld [vmem:[%s242 + $0x40] sm:$0xff]
      %v309 = vld [vmem:[%s242 + $0x48] sm:$0xff]
      %v310 = vld [vmem:[%s242 + $0x50] sm:$0xff]
      %v311 = vld [vmem:[%s242 + $0x58] sm:$0xff]
      %v312 = vld [vmem:[%s242 + $0x60] sm:$0xff]
      %v313 = vld [vmem:[%s242 + $0x68] sm:$0xff]
      %v314 = vld [vmem:[%s242 + $0x70] sm:$0xff]
      %v315 = vld [vmem:[%s242 + $0x78] sm:$0xff]
      %v316 = vld [vmem:[%s252] sm:$0xff]
      %v317 = vld [vmem:[%s252 + $0x8] sm:$0xff]
      %v318 = vld [vmem:[%s252 + $0x10] sm:$0xff]
      %v319 = vld [vmem:[%s252 + $0x18] sm:$0xff]
      %v320 = vld [vmem:[%s252 + $0x20] sm:$0xff]
      %v321 = vld [vmem:[%s252 + $0x28] sm:$0xff]
      %v322 = vld [vmem:[%s252 + $0x30] sm:$0xff]
      %v323 = vld [vmem:[%s252 + $0x38] sm:$0xff]
      %v324 = vld [vmem:[%s252 + $0x40] sm:$0xff]
      %v325 = vld [vmem:[%s252 + $0x48] sm:$0xff]
      %v326 = vld [vmem:[%s252 + $0x50] sm:$0xff]
      %v327 = vld [vmem:[%s252 + $0x58] sm:$0xff]
      %v328 = vld [vmem:[%s252 + $0x60] sm:$0xff]
      %v329 = vld [vmem:[%s252 + $0x68] sm:$0xff]
      %v330 = vld [vmem:[%s252 + $0x70] sm:$0xff]
      %v331 = vld [vmem:[%s252 + $0x78] sm:$0xff]
      %332 = vmatprep.subr.mxu0 0.0
      %333 = vmatpush1.msra.mxu0 %v331
      %334 = vmatprep.subr.mxu0 0.0
      %335 = vmatpush1.msra.mxu0 %v330
      %336 = vmatprep.subr.mxu0 0.0
      %337 = vmatpush1.msra.mxu0 %v329
      %338 = vmatprep.subr.mxu0 0.0
      %339 = vmatpush1.msra.mxu0 %v328
      %340 = vmatprep.subr.mxu0 0.0
      %341 = vmatpush1.msra.mxu0 %v327
      %342 = vmatprep.subr.mxu0 0.0
      %343 = vmatpush1.msra.mxu0 %v326
      %344 = vmatprep.subr.mxu0 0.0
      %345 = vmatpush1.msra.mxu0 %v325
      %346 = vmatprep.subr.mxu0 0.0
      %347 = vmatpush1.msra.mxu0 %v324
      %348 = vmatprep.subr.mxu0 0.0
      %349 = vmatpush1.msra.mxu0 %v323
      %350 = vmatprep.subr.mxu0 0.0
      %351 = vmatpush1.msra.mxu0 %v322
      %352 = vmatprep.subr.mxu0 0.0
      %353 = vmatpush1.msra.mxu0 %v321
      %354 = vmatprep.subr.mxu0 0.0
      %355 = vmatpush1.msra.mxu0 %v320
      %356 = vmatprep.subr.mxu0 0.0
      %357 = vmatpush1.msra.mxu0 %v319
      %358 = vmatprep.subr.mxu0 0.0
      %359 = vmatpush1.msra.mxu0 %v318
      %360 = vmatprep.subr.mxu0 0.0
      %361 = vmatpush1.msra.mxu0 %v317
      %362 = vmatprep.subr.mxu0 0.0
      %363 = vmatpush1.msra.mxu0 %v316
      %364 = vmatprep.subr.mxu0 0.0
      %365 = vmatpush2.msra.mxu0 0.0
      %366 = vmatprep.subr.mxu0 0.0
      %367 = vmatpush2.msra.mxu0 0.0
      %368 = vmatprep.subr.mxu0 0.0
      %369 = vmatpush2.msra.mxu0 0.0
      %370 = vmatprep.subr.mxu0 0.0
      %371 = vmatpush2.msra.mxu0 0.0
      %372 = vmatprep.subr.mxu0 0.0
      %373 = vmatpush2.msra.mxu0 0.0
      %374 = vmatprep.subr.mxu0 0.0
      %375 = vmatpush2.msra.mxu0 0.0
      %376 = vmatprep.subr.mxu0 0.0
      %377 = vmatpush2.msra.mxu0 0.0
      %378 = vmatprep.subr.mxu0 0.0
      %379 = vmatpush2.msra.mxu0 0.0
      %380 = vmatprep.subr.mxu0 0.0
      %381 = vmatpush2.msra.mxu0 0.0
      %382 = vmatprep.subr.mxu0 0.0
      %383 = vmatpush2.msra.mxu0 0.0
      %384 = vmatprep.subr.mxu0 0.0
      %385 = vmatpush2.msra.mxu0 0.0
      %386 = vmatprep.subr.mxu0 0.0
      %387 = vmatpush2.msra.mxu0 0.0
      %388 = vmatprep.subr.mxu0 0.0
      %389 = vmatpush2.msra.mxu0 0.0
      %390 = vmatprep.subr.mxu0 0.0
      %391 = vmatpush2.msra.mxu0 0.0
      %392 = vmatprep.subr.mxu0 0.0
      %393 = vmatpush2.msra.mxu0 0.0
      %394 = vmatprep.subr.mxu0 0.0
      %395 = vmatpush2.msra.mxu0 0.0
      %396 = vmatprep.mubr.f32.mxu0 0.0
      %397 = vmatmul.mubr.f32.gmra.mxu0 %v300
      %v398 = vpop.f32.mrf.mxu0
      %v399 = vadd.f32 0.0, %v398
      %v400 = vpop.f32.mrf.mxu0
      %401 = vmatprep.mubr.f32.mxu0 0.0
      %402 = vmatmul.mubr.f32.gmra.mxu0 %v301
      %v403 = vpop.f32.mrf.mxu0
      %v404 = vadd.f32 0.0, %v403
      %v405 = vpop.f32.mrf.mxu0
      %406 = vmatprep.mubr.f32.mxu0 0.0
      %407 = vmatmul.mubr.f32.gmra.mxu0 %v302
      %v408 = vpop.f32.mrf.mxu0
      %v409 = vadd.f32 0.0, %v408
      %v410 = vpop.f32.mrf.mxu0
      %411 = vmatprep.mubr.f32.mxu0 0.0
      %412 = vmatmul.mubr.f32.gmra.mxu0 %v303
      %v413 = vpop.f32.mrf.mxu0
      %v414 = vadd.f32 0.0, %v413
      %v415 = vpop.f32.mrf.mxu0
      %416 = vmatprep.mubr.f32.mxu0 0.0
      %417 = vmatmul.mubr.f32.gmra.mxu0 %v304
      %v418 = vpop.f32.mrf.mxu0
      %v419 = vadd.f32 0.0, %v418
      %v420 = vpop.f32.mrf.mxu0
      %421 = vmatprep.mubr.f32.mxu0 0.0
      %422 = vmatmul.mubr.f32.gmra.mxu0 %v305
      %v423 = vpop.f32.mrf.mxu0
      %v424 = vadd.f32 0.0, %v423
      %v425 = vpop.f32.mrf.mxu0
      %426 = vmatprep.mubr.f32.mxu0 0.0
      %427 = vmatmul.mubr.f32.gmra.mxu0 %v306
      %v428 = vpop.f32.mrf.mxu0
      %v429 = vadd.f32 0.0, %v428
      %v430 = vpop.f32.mrf.mxu0
      %431 = vmatprep.mubr.f32.mxu0 0.0
      %432 = vmatmul.mubr.f32.gmra.mxu0 %v307
      %v433 = vpop.f32.mrf.mxu0
      %v434 = vadd.f32 0.0, %v433
      %v435 = vpop.f32.mrf.mxu0
      %436 = vmatprep.mubr.f32.mxu0 0.0
      %437 = vmatmul.mubr.f32.gmra.mxu0 %v308
      %v438 = vpop.f32.mrf.mxu0
      %v439 = vadd.f32 0.0, %v438
      %v440 = vpop.f32.mrf.mxu0
      %441 = vmatprep.mubr.f32.mxu0 0.0
      %442 = vmatmul.mubr.f32.gmra.mxu0 %v309
      %v443 = vpop.f32.mrf.mxu0
      %v444 = vadd.f32 0.0, %v443
      %v445 = vpop.f32.mrf.mxu0
      %446 = vmatprep.mubr.f32.mxu0 0.0
      %447 = vmatmul.mubr.f32.gmra.mxu0 %v310
      %v448 = vpop.f32.mrf.mxu0
      %v449 = vadd.f32 0.0, %v448
      %v450 = vpop.f32.mrf.mxu0
      %451 = vmatprep.mubr.f32.mxu0 0.0
      %452 = vmatmul.mubr.f32.gmra.mxu0 %v311
      %v453 = vpop.f32.mrf.mxu0
      %v454 = vadd.f32 0.0, %v453
      %v455 = vpop.f32.mrf.mxu0
      %456 = vmatprep.mubr.f32.mxu0 0.0
      %457 = vmatmul.mubr.f32.gmra.mxu0 %v312
      %v458 = vpop.f32.mrf.mxu0
      %v459 = vadd.f32 0.0, %v458
      %v460 = vpop.f32.mrf.mxu0
      %461 = vmatprep.mubr.f32.mxu0 0.0
      %462 = vmatmul.mubr.f32.gmra.mxu0 %v313
      %v463 = vpop.f32.mrf.mxu0
      %v464 = vadd.f32 0.0, %v463
      %v465 = vpop.f32.mrf.mxu0
      %466 = vmatprep.mubr.f32.mxu0 0.0
      %467 = vmatmul.mubr.f32.gmra.mxu0 %v314
      %v468 = vpop.f32.mrf.mxu0
      %v469 = vadd.f32 0.0, %v468
      %v470 = vpop.f32.mrf.mxu0
      %471 = vmatprep.mubr.f32.mxu0 0.0
      %472 = vmatmul.mubr.f32.gmra.mxu0 %v315
      %v473 = vpop.f32.mrf.mxu0
      %v474 = vadd.f32 0.0, %v473
      %v475 = vpop.f32.mrf.mxu0
      %476 = vdwg.mxu0
      %v477 = vadd.f32 %v284, %v399
      %v478 = vadd.f32 %v285, %v404
      %v479 = vadd.f32 %v286, %v409
      %v480 = vadd.f32 %v287, %v414
      %v481 = vadd.f32 %v288, %v419
      %v482 = vadd.f32 %v289, %v424
      %v483 = vadd.f32 %v290, %v429
      %v484 = vadd.f32 %v291, %v434
      %v485 = vadd.f32 %v292, %v439
      %v486 = vadd.f32 %v293, %v444
      %v487 = vadd.f32 %v294, %v449
      %v488 = vadd.f32 %v295, %v454
      %v489 = vadd.f32 %v296, %v459
      %v490 = vadd.f32 %v297, %v464
      %v491 = vadd.f32 %v298, %v469
      %v492 = vadd.f32 %v299, %v474
      %493 = vst [vmem:[#allocation2] sm:$0xff] %v477
      %494 = vst [vmem:[#allocation2 + $0x8] sm:$0xff] %v478
      %495 = vst [vmem:[#allocation2 + $0x10] sm:$0xff] %v479
      %496 = vst [vmem:[#allocation2 + $0x18] sm:$0xff] %v480
      %497 = vst [vmem:[#allocation2 + $0x20] sm:$0xff] %v481
      %498 = vst [vmem:[#allocation2 + $0x28] sm:$0xff] %v482
      %499 = vst [vmem:[#allocation2 + $0x30] sm:$0xff] %v483
      %500 = vst [vmem:[#allocation2 + $0x38] sm:$0xff] %v484
      %501 = vst [vmem:[#allocation2 + $0x40] sm:$0xff] %v485
      %502 = vst [vmem:[#allocation2 + $0x48] sm:$0xff] %v486
      %503 = vst [vmem:[#allocation2 + $0x50] sm:$0xff] %v487
      %504 = vst [vmem:[#allocation2 + $0x58] sm:$0xff] %v488
      %505 = vst [vmem:[#allocation2 + $0x60] sm:$0xff] %v489
      %506 = vst [vmem:[#allocation2 + $0x68] sm:$0xff] %v490
      %507 = vst [vmem:[#allocation2 + $0x70] sm:$0xff] %v491
      %508 = vst [vmem:[#allocation2 + $0x78] sm:$0xff] %v492
      // Predicated region
      $region37: #{gcn_forward.3} parent=31 // pred_check
        %p509 = pneg %p264
      $region38: #{gcn_forward.3} parent=31 // pred_check_branch
        %511 = sbr.rel (%p509) target = $region40
      $region39: #{gcn_forward.3} parent=31 // pred_region
        %v512 = vld [vmem:[#allocation2] sm:$0xff]
        %v513 = vld [vmem:[#allocation2 + $0x8] sm:$0xff]
        %v514 = vld [vmem:[#allocation2 + $0x10] sm:$0xff]
        %v515 = vld [vmem:[#allocation2 + $0x18] sm:$0xff]
        %v516 = vld [vmem:[#allocation2 + $0x20] sm:$0xff]
        %v517 = vld [vmem:[#allocation2 + $0x28] sm:$0xff]
        %v518 = vld [vmem:[#allocation2 + $0x30] sm:$0xff]
        %v519 = vld [vmem:[#allocation2 + $0x38] sm:$0xff]
        %v520 = vld [vmem:[#allocation2 + $0x40] sm:$0xff]
        %v521 = vld [vmem:[#allocation2 + $0x48] sm:$0xff]
        %v522 = vld [vmem:[#allocation2 + $0x50] sm:$0xff]
        %v523 = vld [vmem:[#allocation2 + $0x58] sm:$0xff]
        %v524 = vld [vmem:[#allocation2 + $0x60] sm:$0xff]
        %v525 = vld [vmem:[#allocation2 + $0x68] sm:$0xff]
        %v526 = vld [vmem:[#allocation2 + $0x70] sm:$0xff]
        %v527 = vld [vmem:[#allocation2 + $0x78] sm:$0xff]
        %v528 = vld [vmem:[%s2] sm:$0x1]
        %v530 = vlaneseq
        %v531 = vshrl.u32 %v530, 7
        %v532 = vsub.s32 0, %v531
        %v533 = vrot.slane %v528, %v532
        %v535 = vadd.f32 %v512, %v533
        %v536 = vadd.f32 %v513, %v533
        %v537 = vadd.f32 %v514, %v533
        %v538 = vadd.f32 %v515, %v533
        %v539 = vadd.f32 %v516, %v533
        %v540 = vadd.f32 %v517, %v533
        %v541 = vadd.f32 %v518, %v533
        %v542 = vadd.f32 %v519, %v533
        %v543 = vadd.f32 %v520, %v533
        %v544 = vadd.f32 %v521, %v533
        %v545 = vadd.f32 %v522, %v533
        %v546 = vadd.f32 %v523, %v533
        %v547 = vadd.f32 %v524, %v533
        %v548 = vadd.f32 %v525, %v533
        %v549 = vadd.f32 %v526, %v533
        %v550 = vadd.f32 %v527, %v533
        %551 = vst [vmem:[%s262] sm:$0xff] %v535
        %552 = vst [vmem:[%s262 + $0x8] sm:$0xff] %v536
        %553 = vst [vmem:[%s262 + $0x10] sm:$0xff] %v537
        %554 = vst [vmem:[%s262 + $0x18] sm:$0xff] %v538
        %555 = vst [vmem:[%s262 + $0x20] sm:$0xff] %v539
        %556 = vst [vmem:[%s262 + $0x28] sm:$0xff] %v540
        %557 = vst [vmem:[%s262 + $0x30] sm:$0xff] %v541
        %558 = vst [vmem:[%s262 + $0x38] sm:$0xff] %v542
        %559 = vst [vmem:[%s262 + $0x40] sm:$0xff] %v543
        %560 = vst [vmem:[%s262 + $0x48] sm:$0xff] %v544
        %561 = vst [vmem:[%s262 + $0x50] sm:$0xff] %v545
        %562 = vst [vmem:[%s262 + $0x58] sm:$0xff] %v546
        %563 = vst [vmem:[%s262 + $0x60] sm:$0xff] %v547
        %564 = vst [vmem:[%s262 + $0x68] sm:$0xff] %v548
        %565 = vst [vmem:[%s262 + $0x70] sm:$0xff] %v549
        %566 = vst [vmem:[%s262 + $0x78] sm:$0xff] %v550
      $region40: #{gcn_forward.3} parent=31 // pred_fallthru
        _
      %s567 = smul.u32 16, %s20
      %p568 = scmp.lt.s32.totalorder %s19, 1
      %s569 = scalar_select %p568, %s19, 1
      %p570 = scmp.lt.s32.totalorder %s567, 15
      %s571 = scalar_select %p570, %s567, 15
      %s572 = smul.addr %s569, 16
      %s573 = sadd.s32 %s571, %s572
      %s574 = smul.addr %s573, 8
      %s575 = scalar_lea.vmem %s3, %s574
      // Predicated region
      $region41: #{gcn_forward.3} parent=31 // pred_check
        %p576 = pneg %p132
      $region42: #{gcn_forward.3} parent=31 // pred_check_branch
        %578 = sbr.rel (%p576) target = $region44
      $region43: #{gcn_forward.3} parent=31 // pred_region
        %s579 = smul.u32 16, %s20
      $region44: #{gcn_forward.3} parent=31 // pred_fallthru
        _
    $region32: #{gcn_forward.3} parent=5 // pred_fallthru
      _
    %p580 = scmp.le.s32.totalorder 2, %s9
    // Predicated region
    $region45: #{gcn_forward.3} parent=5 // pred_check
      %p581 = pneg %p580
    $region46: #{gcn_forward.3} parent=5 // pred_check_branch
      %583 = sbr.rel (%p581) target = $region48
    $region47: #{gcn_forward.3} parent=5 // pred_region
      %s584 = ssub.s32 %s9, 2
      // Predicated region
      $region49: #{gcn_forward.3} parent=47 // pred_check
        %p585 = pneg %p138
      $region50: #{gcn_forward.3} parent=47 // pred_check_branch
        %587 = sbr.rel (%p585) target = $region52
      $region51: #{gcn_forward.3} parent=47 // pred_region
        %s588 = smul.u32 16, %s23
        %p589 = scmp.lt.s32.totalorder %s22, 1
        %s590 = scalar_select %p589, %s22, 1
        %p591 = scmp.lt.s32.totalorder %s588, 15
        %s592 = scalar_select %p591, %s588, 15
        %s593 = smul.addr %s590, 16
        %s594 = sadd.s32 %s592, %s593
        %s595 = smul.addr %s594, 8
        %s596 = scalar_lea.vmem %s3, %s595
      $region52: #{gcn_forward.3} parent=47 // pred_fallthru
        _
    $region48: #{gcn_forward.3} parent=5 // pred_fallthru
      _
  $region6: #{gcn_forward.3} parent=0 // loop_footer
    %s13 = sadd.s32 1, %s9
  $region7: #{gcn_forward.3} parent=0 // loop_footer_branch
    %8 = sbr.rel target = $region3
  $region8: #{gcn_forward.3} parent=0 // loop_exit
    _

</llo_original>
